<compile_context>
chip_gen: v6e
topology: v6e:2x2x1
jax: 0.10.0
libtpu: 0.0.40
codegen_flags: <defaults>
</compile_context>

<pallas_src>
import jax
import jax.numpy as jnp
import numpy as np
from jax import lax
from jax.experimental import pallas as pl
from jax.experimental.pallas import tpu as pltpu

# ----- model config (small, consistent with the attention/fusion path) -----
B = 2
DIM_V = 32            # visual channels
DIM_Q = 32            # question vector dim
ATT_DIM_V = 32
ATT_DIM_Q = 32
DIM_MM = 32           # fused attention dim (== ATT_DIM_V == ATT_DIM_Q for mul-fusion)
NB_GLIMPSES = 2
DIM_H = 32            # fusion hidden size per glimpse
W, H = 8, 8
WH = W * H
DIM_FUSED = NB_GLIMPSES * DIM_H
LANES = B * WH        # 128 — batch folded into the lane axis

assert ATT_DIM_V == ATT_DIM_Q == DIM_MM
assert LANES == 128

# ---- data-slab layout (runtime, built by the wrapper): (D_ROWS, 128) f32 ----
D_V = 0                      # rows  0:32  v_cm  (DIM_V, B*WH) channel-major, batch in lanes
D_QCM = DIM_V                # rows 32:64  q_cm  (DIM_Q, B*WH) q replicated per batch segment
D_ONE = 2 * DIM_V            # row  64     ones  (folds the stage-1 biases into the matmul)
D_QRM = 2 * DIM_V + 8        # rows 72:74  q row-major (B, DIM_Q) at lanes 0:DIM_Q
D_ROWS = 2 * DIM_V + 16      # 80

# ---- param-slab layout (static, built once in prepare_params): (P_ROWS, 128) f32 ----
P_W1 = 0        # rows   0: 64, lanes 0:D_ROWS : [[wv.T,0,bv],[0,wq.T,bq]] bias-augmented
P_WFB = 64      # rows  64:128, lanes 0:64     : block-diag per-glimpse fusion weight
P_WQF = 128     # rows 128:160, lanes 0:64     : linear_q_fusion weight
P_WA = 160      # rows 160:162, lanes 0:32     : conv_att weight (transposed)
P_BA = 168      # rows 168:170, lanes 0:128    : conv_att bias (pre-broadcast over lanes)
P_BF = 176      # rows 176:178, lanes 0:64     : fusion bias (pre-broadcast over batch)
P_BQF = 184     # rows 184:186, lanes 0:64     : linear_q_fusion bias (pre-broadcast over batch)
P_ROWS = 192


# ---------------------------------------------------------------------------
# Fused kernel: attention (1x1 convs + mul-fusion + softmax + weighted sum)
# followed immediately by the glimpse fusion stage.  Two inputs only:
#   d_ref : (80, 128) runtime data slab (see layout above)
#   p_ref : (192,128) static parameter slab
# ---------------------------------------------------------------------------
def mcb_att_fusion_kernel(d_ref, p_ref, o_ref, vatt_sc):
    # Stage 1: conv_v_att (1x1 conv == channel matmul) on v AND linear_q_att on
    # the pre-broadcast q as ONE bias-augmented block-diagonal matmul + tanh.
    #   rows  0:32 -> x_v                       (ATT_DIM_V, B*WH)
    #   rows 32:64 -> x_q (replicated per batch segment)   (ATT_DIM_Q, B*WH)
    x1 = jnp.tanh(jnp.dot(p_ref[P_W1:P_W1 + 2 * DIM_MM, 0:D_ROWS], d_ref[...],
                          preferred_element_type=jnp.float32))       # (64, 128)

    # _fusion_att realized as elementwise multiply (MLB-style), activation tanh
    x_att = jnp.tanh(x1[0:DIM_MM, :] * x1[DIM_MM:2 * DIM_MM, :])      # (DIM_MM, 128)

    # conv_att (1x1): per-glimpse attention logits over spatial positions
    logits = (jnp.dot(p_ref[P_WA:P_WA + NB_GLIMPSES, 0:DIM_MM], x_att,
                      preferred_element_type=jnp.float32)
              + p_ref[P_BA:P_BA + NB_GLIMPSES, :])                    # (G, 128)

    # Softmax stabilizer shared across batch segments: a per-row constant shift
    # leaves each 64-lane-segment softmax unchanged -> one max, one exp.
    e = jnp.exp(logits - jnp.max(logits, axis=1, keepdims=True))      # (G, 128)

    v_cm = d_ref[D_V:D_V + DIM_V, :]                                  # (DIM_V, 128)

    # Per-batch normalization + attention-weighted sum of the ORIGINAL visual
    # features (static unroll over the B=2 lane segments); results go straight
    # into the VMEM scratch at static lane offsets (no concat chains).
    for b in range(B):
        e_b = e[:, b * WH:(b + 1) * WH]                               # (G, WH)
        denom = jnp.sum(e_b, axis=1, keepdims=True)                   # (G, 1)
        vatt_b = lax.dot_general(                                     # (G, DIM_V)
            e_b, v_cm[:, b * WH:(b + 1) * WH],
            (((1,), (1,)), ((), ())),
            preferred_element_type=jnp.float32) / denom
        for g in range(NB_GLIMPSES):
            vatt_sc[b:b + 1, g * DIM_V:(g + 1) * DIM_V] = vatt_b[g:g + 1, :]

    # ---------------- fusion stage -----------------------------------------
    # per-glimpse linear_v_fusion as ONE block-diagonal matmul + tanh
    x_vf = jnp.tanh(
        jnp.dot(vatt_sc[...],
                p_ref[P_WFB:P_WFB + NB_GLIMPSES * DIM_V, 0:DIM_FUSED],
                preferred_element_type=jnp.float32)
        + p_ref[P_BF:P_BF + B, 0:DIM_FUSED])                          # (B, DIM_FUSED)

    # linear_q_fusion + tanh (row-major q read from the data slab)
    x_qf = jnp.tanh(
        jnp.dot(d_ref[D_QRM:D_QRM + B, 0:DIM_Q],
                p_ref[P_WQF:P_WQF + DIM_Q, 0:DIM_FUSED],
                preferred_element_type=jnp.float32)
        + p_ref[P_BQF:P_BQF + B, 0:DIM_FUSED])                        # (B, DIM_FUSED)

    # _fusion_classif realized as elementwise multiply; direct (B, DIM_FUSED) store
    o_ref[...] = x_vf * x_qf


# ---------------------------------------------------------------------------
# Wrapper: one grid-less pallas_call with exactly two inputs.
# All layout work (channel-major fold, q replication, bias ones row, q rows)
# happens here in one small XLA fusion.
# ---------------------------------------------------------------------------
def mcb_forward(input_q, input_v, pslab):
    if input_v.shape != (B, DIM_V, W, H):
        raise ValueError(f"expected visual features of shape {(B, DIM_V, W, H)}, "
                         f"got {input_v.shape}")
    if input_q.shape != (B, DIM_Q):
        raise ValueError(f"expected question features of shape {(B, DIM_Q)}, "
                         f"got {input_q.shape}")
    if pslab.shape != (P_ROWS, 128):
        raise ValueError(f"expected parameter slab of shape {(P_ROWS, 128)}, "
                         f"got {pslab.shape}")

    # channel-major, batch folded into lanes: v_cm[d, b*WH+s] = v[b, d, s]
    v_cm = jnp.transpose(input_v.reshape(B, DIM_V, WH), (1, 0, 2)).reshape(DIM_V, LANES)
    # q replicated over each batch's 64 lanes: q_cm[d, b*WH+s] = q[b, d]
    q_cm = jnp.broadcast_to(input_q.T[:, :, None], (DIM_Q, B, WH)).reshape(DIM_Q, LANES)
    # tail block: ones row (bias fold) + row-major q
    tail = jnp.zeros((D_ROWS - 2 * DIM_V, LANES), jnp.float32)
    tail = tail.at[D_ONE - 2 * DIM_V, :].set(1.0)
    tail = tail.at[D_QRM - 2 * DIM_V:D_QRM - 2 * DIM_V + B, 0:DIM_Q].set(input_q)
    dslab = jnp.concatenate([v_cm, q_cm, tail], axis=0)               # (80, 128)

    return pl.pallas_call(
        mcb_att_fusion_kernel,
        out_shape=jax.ShapeDtypeStruct((B, DIM_FUSED), jnp.float32),
        scratch_shapes=[pltpu.VMEM((B, NB_GLIMPSES * DIM_V), jnp.float32)],
    )(dslab, pslab)


def prepare_params(p):
    """One-time static packing of the PyTorch-layout parameters into one slab."""
    ps = np.zeros((P_ROWS, 128), np.float32)

    # Stage-1 bias-augmented block-diagonal weight:
    #   rows 0:32  cols 0:32  = wv.T ; col D_ONE = bv
    #   rows 32:64 cols 32:64 = wq.T ; col D_ONE = bq
    # cols D_QRM:D_ROWS stay zero so the q rows of the data slab contribute 0.
    ps[0:DIM_MM, 0:DIM_V] = np.asarray(p['wv']).T
    ps[DIM_MM:2 * DIM_MM, DIM_V:2 * DIM_V] = np.asarray(p['wq']).T
    ps[0:DIM_MM, D_ONE] = np.asarray(p['bv'])[0]
    ps[DIM_MM:2 * DIM_MM, D_ONE] = np.asarray(p['bq'])[0]

    # block-diagonal per-glimpse fusion weight
    for g in range(NB_GLIMPSES):
        ps[P_WFB + g * DIM_V:P_WFB + (g + 1) * DIM_V,
           g * DIM_H:(g + 1) * DIM_H] = np.asarray(p['wf'][g])

    ps[P_WQF:P_WQF + DIM_Q, 0:DIM_FUSED] = np.asarray(p['wqf'])
    ps[P_WA:P_WA + NB_GLIMPSES, 0:DIM_MM] = np.asarray(p['wa']).T
    ps[P_BA:P_BA + NB_GLIMPSES, :] = np.asarray(p['ba']).T            # (G,1) -> (G,128)
    ps[P_BF:P_BF + B, 0:DIM_FUSED] = np.asarray(p['bf']).reshape(1, DIM_FUSED)
    ps[P_BQF:P_BQF + B, 0:DIM_FUSED] = np.asarray(p['bqf'])
    return jnp.asarray(ps)


# ---------------------------------------------------------------------------
# Pure-JAX reference (uses the raw PyTorch-layout params)
# ---------------------------------------------------------------------------
def reference(input_q, input_v, p):
    v = jnp.transpose(input_v.reshape(B, DIM_V, WH), (0, 2, 1))      # [B, WH, DIM_V]
    x_v = jnp.tanh(v @ p['wv'] + p['bv'])                            # [B, WH, ATT_DIM_V]
    x_q = jnp.tanh(input_q @ p['wq'] + p['bq'])                      # [B, ATT_DIM_Q]
    x_att = jnp.tanh(x_v * x_q[:, None, :])                          # [B, WH, DIM_MM]
    logits = x_att @ p['wa'] + p['ba']                               # [B, WH, G]
    att = jax.nn.softmax(logits, axis=1)
    vatt = jnp.einsum('bwg,bwd->bgd', att, v)                        # [B, G, DIM_V]
    parts = [jnp.tanh(vatt[:, g, :] @ p['wf'][g] + p['bf'][g])
             for g in range(NB_GLIMPSES)]
    xv = jnp.concatenate(parts, axis=1)                              # [B, G*DIM_H]
    xq = jnp.tanh(input_q @ p['wqf'] + p['bqf'][0])
    return xv * xq


if __name__ == "__main__":
    key = jax.random.PRNGKey(0)
    ks = jax.random.split(key, 12)
    input_v = jax.random.normal(ks[0], (B, DIM_V, W, H), jnp.float32)
    input_q = jax.random.normal(ks[1], (B, DIM_Q), jnp.float32)

    params = {
        # conv_v_att: 1x1 conv weight stored as [Cin, Cout]
        'wv':  jax.random.normal(ks[2], (DIM_V, ATT_DIM_V), jnp.float32) * 0.1,
        'bv':  jax.random.normal(ks[3], (1, ATT_DIM_V), jnp.float32) * 0.1,
        # linear_q_att: stored as [in, out]
        'wq':  jax.random.normal(ks[4], (DIM_Q, ATT_DIM_Q), jnp.float32) * 0.1,
        'bq':  jax.random.normal(ks[5], (1, ATT_DIM_Q), jnp.float32) * 0.1,
        # conv_att: 1x1 conv weight stored as [dim_mm, nb_glimpses]
        'wa':  jax.random.normal(ks[6], (DIM_MM, NB_GLIMPSES), jnp.float32) * 0.1,
        'ba':  jax.random.normal(ks[7], (1, NB_GLIMPSES), jnp.float32) * 0.1,
        # list_linear_v_fusion: one [dim_v, dim_h] per glimpse
        'wf':  jax.random.normal(ks[8], (NB_GLIMPSES, DIM_V, DIM_H), jnp.float32) * 0.1,
        'bf':  jax.random.normal(ks[9], (NB_GLIMPSES, DIM_H), jnp.float32) * 0.1,
        # linear_q_fusion: [dim_q, nb_glimpses*dim_h]
        'wqf': jax.random.normal(ks[10], (DIM_Q, DIM_FUSED), jnp.float32) * 0.1,
        'bqf': jax.random.normal(ks[11], (1, DIM_FUSED), jnp.float32) * 0.1,
    }

    pslab = prepare_params(params)
    fwd = jax.jit(mcb_forward)
    out = jax.block_until_ready(fwd(input_q, input_v, pslab))

    ref = reference(input_q, input_v, params)
    assert out.shape == (B, DIM_FUSED)
    err = float(jnp.max(jnp.abs(out - ref)))
    # softmax reciprocal is now exact; remaining tolerance only covers MXU f32
    # matmul precision differences vs. the XLA-default reference matmuls
    assert err < 5e-3, f"mismatch: max abs err {err}"

    print("KERNEL_OK")
</pallas_src>

<mosaic_0001>
module attributes {stable_mosaic.version = 11 : i64} {
  func.func @mcb_att_fusion_kernel(%arg0: memref<80x128xf32, #tpu.memory_space<vmem>>, %arg1: memref<192x128xf32, #tpu.memory_space<vmem>>, %arg2: memref<2x64xf32, #tpu.memory_space<vmem>>, %arg3: memref<2x64xf32, #tpu.memory_space<vmem>>) attributes {dimension_semantics = [], scalar_prefetch = 0 : i64, scratch_operands = 1 : i64, tpu.core_type = #tpu.core_type<tc>} {
    %c0 = arith.constant 0 : index
    %c0_0 = arith.constant 0 : index
    %0 = vector.load %arg1[%c0, %c0_0] : memref<192x128xf32, #tpu.memory_space<vmem>>, vector<64x80xf32>
    %c0_1 = arith.constant 0 : index
    %c0_2 = arith.constant 0 : index
    %1 = vector.load %arg0[%c0_1, %c0_2] : memref<80x128xf32, #tpu.memory_space<vmem>>, vector<80x128xf32>
    %cst = arith.constant dense<0.000000e+00> : vector<64x128xf32>
    %2 = tpu.matmul %0, %1, %cst {dimension_numbers = #tpu.dot_dimension_numbers<[1], [0], [0], [1], [0, 0, 1, 1], [], []>} : vector<64x80xf32>, vector<80x128xf32>, vector<64x128xf32> -> vector<64x128xf32>
    %3 = math.tanh %2 : vector<64x128xf32>
    %4 = vector.extract_strided_slice %3 {offsets = [0, 0], sizes = [32, 128], strides = [1, 1]} : vector<64x128xf32> to vector<32x128xf32>
    %5 = vector.extract_strided_slice %3 {offsets = [32, 0], sizes = [32, 128], strides = [1, 1]} : vector<64x128xf32> to vector<32x128xf32>
    %6 = arith.mulf %4, %5 : vector<32x128xf32>
    %7 = math.tanh %6 : vector<32x128xf32>
    %c160 = arith.constant 160 : index
    %c0_3 = arith.constant 0 : index
    %8 = vector.load %arg1[%c160, %c0_3] : memref<192x128xf32, #tpu.memory_space<vmem>>, vector<2x32xf32>
    %cst_4 = arith.constant dense<0.000000e+00> : vector<2x128xf32>
    %9 = tpu.matmul %8, %7, %cst_4 {dimension_numbers = #tpu.dot_dimension_numbers<[1], [0], [0], [1], [0, 0, 1, 1], [], []>} : vector<2x32xf32>, vector<32x128xf32>, vector<2x128xf32> -> vector<2x128xf32>
    %c168 = arith.constant 168 : index
    %c0_5 = arith.constant 0 : index
    %10 = vector.load %arg1[%c168, %c0_5] : memref<192x128xf32, #tpu.memory_space<vmem>>, vector<2x128xf32>
    %11 = arith.addf %9, %10 : vector<2x128xf32>
    %cst_6 = arith.constant dense<0xFF800000> : vector<2xf32>
    %12 = vector.multi_reduction <maximumf>, %11, %cst_6 [1] : vector<2x128xf32> to vector<2xf32>
    %13 = vector.shape_cast %12 : vector<2xf32> to vector<2x1xf32>
    %14 = vector.broadcast %13 : vector<2x1xf32> to vector<2x128xf32>
    %15 = arith.subf %11, %14 : vector<2x128xf32>
    %16 = math.exp %15 : vector<2x128xf32>
    %c0_7 = arith.constant 0 : index
    %c0_8 = arith.constant 0 : index
    %17 = vector.load %arg0[%c0_7, %c0_8] : memref<80x128xf32, #tpu.memory_space<vmem>>, vector<32x128xf32>
    %18 = vector.extract_strided_slice %16 {offsets = [0, 0], sizes = [2, 64], strides = [1, 1]} : vector<2x128xf32> to vector<2x64xf32>
    %cst_9 = arith.constant dense<0.000000e+00> : vector<2xf32>
    %19 = vector.multi_reduction <add>, %18, %cst_9 [1] : vector<2x64xf32> to vector<2xf32>
    %20 = vector.shape_cast %19 : vector<2xf32> to vector<2x1xf32>
    %21 = vector.extract_strided_slice %17 {offsets = [0, 0], sizes = [32, 64], strides = [1, 1]} : vector<32x128xf32> to vector<32x64xf32>
    %cst_10 = arith.constant dense<0.000000e+00> : vector<2x32xf32>
    %22 = tpu.matmul %18, %21, %cst_10 {dimension_numbers = #tpu.dot_dimension_numbers<[1], [1], [0], [0], [0, 0, 1, 0], [], []>} : vector<2x64xf32>, vector<32x64xf32>, vector<2x32xf32> -> vector<2x32xf32>
    %23 = vector.broadcast %20 : vector<2x1xf32> to vector<2x32xf32>
    %24 = arith.divf %22, %23 : vector<2x32xf32>
    %25 = vector.extract_strided_slice %24 {offsets = [0, 0], sizes = [1, 32], strides = [1, 1]} : vector<2x32xf32> to vector<1x32xf32>
    %c0_11 = arith.constant 0 : index
    %c0_12 = arith.constant 0 : index
    %26 = vector.load %arg3[%c0_11, %c0_12] : memref<2x64xf32, #tpu.memory_space<vmem>>, vector<1x32xf32>
    tpu.vector_store %arg3[%c0_11, %c0_12], %25 {strides = array<i32>} : memref<2x64xf32, #tpu.memory_space<vmem>>, vector<1x32xf32>,
    %27 = vector.extract_strided_slice %24 {offsets = [1, 0], sizes = [1, 32], strides = [1, 1]} : vector<2x32xf32> to vector<1x32xf32>
    %c0_13 = arith.constant 0 : index
    %c32 = arith.constant 32 : index
    %28 = vector.load %arg3[%c0_13, %c32] : memref<2x64xf32, #tpu.memory_space<vmem>>, vector<1x32xf32>
    tpu.vector_store %arg3[%c0_13, %c32], %27 {strides = array<i32>} : memref<2x64xf32, #tpu.memory_space<vmem>>, vector<1x32xf32>,
    %29 = vector.extract_strided_slice %16 {offsets = [0, 64], sizes = [2, 64], strides = [1, 1]} : vector<2x128xf32> to vector<2x64xf32>
    %cst_14 = arith.constant dense<0.000000e+00> : vector<2xf32>
    %30 = vector.multi_reduction <add>, %29, %cst_14 [1] : vector<2x64xf32> to vector<2xf32>
    %31 = vector.shape_cast %30 : vector<2xf32> to vector<2x1xf32>
    %32 = vector.extract_strided_slice %17 {offsets = [0, 64], sizes = [32, 64], strides = [1, 1]} : vector<32x128xf32> to vector<32x64xf32>
    %cst_15 = arith.constant dense<0.000000e+00> : vector<2x32xf32>
    %33 = tpu.matmul %29, %32, %cst_15 {dimension_numbers = #tpu.dot_dimension_numbers<[1], [1], [0], [0], [0, 0, 1, 0], [], []>} : vector<2x64xf32>, vector<32x64xf32>, vector<2x32xf32> -> vector<2x32xf32>
    %34 = vector.broadcast %31 : vector<2x1xf32> to vector<2x32xf32>
    %35 = arith.divf %33, %34 : vector<2x32xf32>
    %36 = vector.extract_strided_slice %35 {offsets = [0, 0], sizes = [1, 32], strides = [1, 1]} : vector<2x32xf32> to vector<1x32xf32>
    %c1 = arith.constant 1 : index
    %c0_16 = arith.constant 0 : index
    %37 = vector.load %arg3[%c1, %c0_16] : memref<2x64xf32, #tpu.memory_space<vmem>>, vector<1x32xf32>
    tpu.vector_store %arg3[%c1, %c0_16], %36 {strides = array<i32>} : memref<2x64xf32, #tpu.memory_space<vmem>>, vector<1x32xf32>,
    %38 = vector.extract_strided_slice %35 {offsets = [1, 0], sizes = [1, 32], strides = [1, 1]} : vector<2x32xf32> to vector<1x32xf32>
    %c1_17 = arith.constant 1 : index
    %c32_18 = arith.constant 32 : index
    %39 = vector.load %arg3[%c1_17, %c32_18] : memref<2x64xf32, #tpu.memory_space<vmem>>, vector<1x32xf32>
    tpu.vector_store %arg3[%c1_17, %c32_18], %38 {strides = array<i32>} : memref<2x64xf32, #tpu.memory_space<vmem>>, vector<1x32xf32>,
    %c0_19 = arith.constant 0 : index
    %c0_20 = arith.constant 0 : index
    %40 = vector.load %arg3[%c0_19, %c0_20] : memref<2x64xf32, #tpu.memory_space<vmem>>, vector<2x64xf32>
    %c64 = arith.constant 64 : index
    %c0_21 = arith.constant 0 : index
    %41 = vector.load %arg1[%c64, %c0_21] : memref<192x128xf32, #tpu.memory_space<vmem>>, vector<64x64xf32>
    %cst_22 = arith.constant dense<0.000000e+00> : vector<2x64xf32>
    %42 = tpu.matmul %40, %41, %cst_22 {dimension_numbers = #tpu.dot_dimension_numbers<[1], [0], [0], [1], [0, 0, 1, 1], [], []>} : vector<2x64xf32>, vector<64x64xf32>, vector<2x64xf32> -> vector<2x64xf32>
    %c176 = arith.constant 176 : index
    %c0_23 = arith.constant 0 : index
    %43 = vector.load %arg1[%c176, %c0_23] : memref<192x128xf32, #tpu.memory_space<vmem>>, vector<2x64xf32>
    %44 = arith.addf %42, %43 : vector<2x64xf32>
    %45 = math.tanh %44 : vector<2x64xf32>
    %c72 = arith.constant 72 : index
    %c0_24 = arith.constant 0 : index
    %46 = vector.load %arg0[%c72, %c0_24] : memref<80x128xf32, #tpu.memory_space<vmem>>, vector<2x32xf32>
    %c128 = arith.constant 128 : index
    %c0_25 = arith.constant 0 : index
    %47 = vector.load %arg1[%c128, %c0_25] : memref<192x128xf32, #tpu.memory_space<vmem>>, vector<32x64xf32>
    %cst_26 = arith.constant dense<0.000000e+00> : vector<2x64xf32>
    %48 = tpu.matmul %46, %47, %cst_26 {dimension_numbers = #tpu.dot_dimension_numbers<[1], [0], [0], [1], [0, 0, 1, 1], [], []>} : vector<2x32xf32>, vector<32x64xf32>, vector<2x64xf32> -> vector<2x64xf32>
    %c184 = arith.constant 184 : index
    %c0_27 = arith.constant 0 : index
    %49 = vector.load %arg1[%c184, %c0_27] : memref<192x128xf32, #tpu.memory_space<vmem>>, vector<2x64xf32>
    %50 = arith.addf %48, %49 : vector<2x64xf32>
    %51 = math.tanh %50 : vector<2x64xf32>
    %52 = arith.mulf %45, %51 : vector<2x64xf32>
    %c0_28 = arith.constant 0 : index
    %c0_29 = arith.constant 0 : index
    %53 = vector.load %arg2[%c0_28, %c0_29] : memref<2x64xf32, #tpu.memory_space<vmem>>, vector<2x64xf32>
    tpu.vector_store %arg2[%c0_28, %c0_29], %52 {strides = array<i32>} : memref<2x64xf32, #tpu.memory_space<vmem>>, vector<2x64xf32>,
    return
  }
}

</mosaic_0001>

<llo_original>
// kernel: mcb_forward.1
$region0: #{mcb_forward.1}
  #allocation0 [shape = 'u32[]', space=smem, size = 0x4, offset = 0x4, fixed_abs, tag = 'smem constant byte address 0x4 - core index']
  #allocation1 [shape = 'u32[144,128]{1,0:T(1,128)}', space=vmem, size = 0x12000, scoped, tag = 'internal scratch']
  #allocation2 [shape = 'f32[2,64]{1,0:T(2,128)}', space=vmem, size = 0x400, scoped, tag = 'scratch operand']
  %s0 = inlined_call_operand.vmem [shape: f32[80,128], index: 0, kind: input, shape index: {}]
  %s1 = inlined_call_operand.vmem [shape: f32[192,128], index: 1, kind: input, shape index: {}]
  %s2 = inlined_call_operand.hbm [shape: f32[2,64], index: 2, kind: output, shape index: {}]
  %s3 = sld [smem:[#allocation0]]
  $region18: #{mcb_forward.1} parent=0
    _
  %s5 = ssub.s32 1, %s3
  %s6 = scalar_select 0, %s5, %s3
  $region1: #{mcb_forward.1} parent=0
    #allocation3 [shape = 'u8[1024]{0}', space=vmem, size = 0x400, scoped, tag = 'output window, operand 0, single buffered']
    #allocation4 [shape = 's32[1]{0}', space=sflag, size = 0x4, scoped, tag = 'scoped memory for mcb_forward.1']
    %7 = vsyncpa [#allocation4], 0
    // Predicated region
    $region2: #{mcb_forward.1} parent=1 // pred_check
      _
    $region3: #{mcb_forward.1} parent=1 // pred_check_branch
      %9 = sbr.rel (0) target = $region5
    $region4: #{mcb_forward.1} parent=1 // pred_region
      _
    $region5: #{mcb_forward.1} parent=1 // pred_fallthru
      _
    // Predicated region
    $region6: #{mcb_forward.1} parent=1 // pred_check
      _
    $region7: #{mcb_forward.1} parent=1 // pred_check_branch
      %11 = sbr.rel (0) target = $region9
    $region8: #{mcb_forward.1} parent=1 // pred_region
      _
    $region9: #{mcb_forward.1} parent=1 // pred_fallthru
      _
    %v12 = vld [vmem:[%s1] sm:$0xff]
    %v13 = vld [vmem:[%s1 + $0x8] sm:$0xff]
    %v14 = vld [vmem:[%s1 + $0x10] sm:$0xff]
    %v15 = vld [vmem:[%s1 + $0x18] sm:$0xff]
    %v16 = vld [vmem:[%s1 + $0x20] sm:$0xff]
    %v17 = vld [vmem:[%s1 + $0x28] sm:$0xff]
    %v18 = vld [vmem:[%s1 + $0x30] sm:$0xff]
    %v19 = vld [vmem:[%s1 + $0x38] sm:$0xff]
    %v20 = vld [vmem:[%s0] sm:$0xff]
    %v21 = vld [vmem:[%s0 + $0x8] sm:$0xff]
    %v22 = vld [vmem:[%s0 + $0x10] sm:$0xff]
    %v23 = vld [vmem:[%s0 + $0x18] sm:$0xff]
    %v24 = vld [vmem:[%s0 + $0x20] sm:$0xff]
    %v25 = vld [vmem:[%s0 + $0x28] sm:$0xff]
    %v26 = vld [vmem:[%s0 + $0x30] sm:$0xff]
    %v27 = vld [vmem:[%s0 + $0x38] sm:$0xff]
    %v28 = vld [vmem:[%s0 + $0x40] sm:$0xff]
    %v29 = vld [vmem:[%s0 + $0x48] sm:$0xff]
    %vm30 = vcmask 654336
    %v32 = vsel %vm30, %v12, 0
    %v35 = vsel %vm30, %v13, 0
    %v38 = vsel %vm30, %v14, 0
    %v41 = vsel %vm30, %v15, 0
    %v44 = vsel %vm30, %v16, 0
    %v47 = vsel %vm30, %v17, 0
    %v50 = vsel %vm30, %v18, 0
    %v53 = vsel %vm30, %v19, 0
    %55 = vmatprep.subr.mxu0 0.0
    %56 = vmatpush1.msra.mxu0 0.0
    %57 = vmatprep.subr.mxu0 0.0
    %58 = vmatpush1.msra.mxu0 0.0
    %59 = vmatprep.subr.mxu0 0.0
    %60 = vmatpush1.msra.mxu0 0.0
    %61 = vmatprep.subr.mxu0 0.0
    %62 = vmatpush1.msra.mxu0 0.0
    %63 = vmatprep.subr.mxu0 0.0
    %64 = vmatpush1.msra.mxu0 0.0
    %65 = vmatprep.subr.mxu0 0.0
    %66 = vmatpush1.msra.mxu0 0.0
    %67 = vmatprep.subr.mxu0 0.0
    %68 = vmatpush1.msra.mxu0 %v29
    %69 = vmatprep.subr.mxu0 0.0
    %70 = vmatpush1.msra.mxu0 %v28
    %71 = vmatprep.subr.mxu0 0.0
    %72 = vmatpush1.msra.mxu0 %v27
    %73 = vmatprep.subr.mxu0 0.0
    %74 = vmatpush1.msra.mxu0 %v26
    %75 = vmatprep.subr.mxu0 0.0
    %76 = vmatpush1.msra.mxu0 %v25
    %77 = vmatprep.subr.mxu0 0.0
    %78 = vmatpush1.msra.mxu0 %v24
    %79 = vmatprep.subr.mxu0 0.0
    %80 = vmatpush1.msra.mxu0 %v23
    %81 = vmatprep.subr.mxu0 0.0
    %82 = vmatpush1.msra.mxu0 %v22
    %83 = vmatprep.subr.mxu0 0.0
    %84 = vmatpush1.msra.mxu0 %v21
    %85 = vmatprep.subr.mxu0 0.0
    %86 = vmatpush1.msra.mxu0 %v20
    %87 = vmatprep.subr.mxu0 0.0
    %88 = vmatpush2.msra.mxu0 0.0
    %89 = vmatprep.subr.mxu0 0.0
    %90 = vmatpush2.msra.mxu0 0.0
    %91 = vmatprep.subr.mxu0 0.0
    %92 = vmatpush2.msra.mxu0 0.0
    %93 = vmatprep.subr.mxu0 0.0
    %94 = vmatpush2.msra.mxu0 0.0
    %95 = vmatprep.subr.mxu0 0.0
    %96 = vmatpush2.msra.mxu0 0.0
    %97 = vmatprep.subr.mxu0 0.0
    %98 = vmatpush2.msra.mxu0 0.0
    %99 = vmatprep.subr.mxu0 0.0
    %100 = vmatpush2.msra.mxu0 0.0
    %101 = vmatprep.subr.mxu0 0.0
    %102 = vmatpush2.msra.mxu0 0.0
    %103 = vmatprep.subr.mxu0 0.0
    %104 = vmatpush2.msra.mxu0 0.0
    %105 = vmatprep.subr.mxu0 0.0
    %106 = vmatpush2.msra.mxu0 0.0
    %107 = vmatprep.subr.mxu0 0.0
    %108 = vmatpush2.msra.mxu0 0.0
    %109 = vmatprep.subr.mxu0 0.0
    %110 = vmatpush2.msra.mxu0 0.0
    %111 = vmatprep.subr.mxu0 0.0
    %112 = vmatpush2.msra.mxu0 0.0
    %113 = vmatprep.subr.mxu0 0.0
    %114 = vmatpush2.msra.mxu0 0.0
    %115 = vmatprep.subr.mxu0 0.0
    %116 = vmatpush2.msra.mxu0 0.0
    %117 = vmatprep.subr.mxu0 0.0
    %118 = vmatpush2.msra.mxu0 0.0
    %119 = vmatprep.mubr.f32.mxu0 0.0
    %120 = vmatmul.mubr.f32.gmra.mxu0 %v32
    %v121 = vpop.f32.mrf.mxu0
    %v122 = vadd.f32 0.0, %v121
    %v123 = vpop.f32.mrf.mxu0
    %124 = vmatprep.mubr.f32.mxu0 0.0
    %125 = vmatmul.mubr.f32.gmra.mxu0 %v35
    %v126 = vpop.f32.mrf.mxu0
    %v127 = vadd.f32 0.0, %v126
    %v128 = vpop.f32.mrf.mxu0
    %129 = vmatprep.mubr.f32.mxu0 0.0
    %130 = vmatmul.mubr.f32.gmra.mxu0 %v38
    %v131 = vpop.f32.mrf.mxu0
    %v132 = vadd.f32 0.0, %v131
    %v133 = vpop.f32.mrf.mxu0
    %134 = vmatprep.mubr.f32.mxu0 0.0
    %135 = vmatmul.mubr.f32.gmra.mxu0 %v41
    %v136 = vpop.f32.mrf.mxu0
    %v137 = vadd.f32 0.0, %v136
    %v138 = vpop.f32.mrf.mxu0
    %139 = vmatprep.mubr.f32.mxu0 0.0
    %140 = vmatmul.mubr.f32.gmra.mxu0 %v44
    %v141 = vpop.f32.mrf.mxu0
    %v142 = vadd.f32 0.0, %v141
    %v143 = vpop.f32.mrf.mxu0
    %144 = vmatprep.mubr.f32.mxu0 0.0
    %145 = vmatmul.mubr.f32.gmra.mxu0 %v47
    %v146 = vpop.f32.mrf.mxu0
    %v147 = vadd.f32 0.0, %v146
    %v148 = vpop.f32.mrf.mxu0
    %149 = vmatprep.mubr.f32.mxu0 0.0
    %150 = vmatmul.mubr.f32.gmra.mxu0 %v50
    %v151 = vpop.f32.mrf.mxu0
    %v152 = vadd.f32 0.0, %v151
    %v153 = vpop.f32.mrf.mxu0
    %154 = vmatprep.mubr.f32.mxu0 0.0
    %155 = vmatmul.mubr.f32.gmra.mxu0 %v53
    %v156 = vpop.f32.mrf.mxu0
    %v157 = vadd.f32 0.0, %v156
    %v158 = vpop.f32.mrf.mxu0
    %159 = vdwg.mxu0
    %v160 = vtanh.pop %v122
    %v161 = vtanh.pop %v127
    %v162 = vtanh.pop %v132
    %v163 = vtanh.pop %v137
    %v164 = vtanh.pop %v142
    %v165 = vtanh.pop %v147
    %v166 = vtanh.pop %v152
    %v167 = vtanh.pop %v157
    %v168 = vmul.f32 %v160, %v164
    %v169 = vmul.f32 %v161, %v165
    %v170 = vmul.f32 %v162, %v166
    %v171 = vmul.f32 %v163, %v167
    %v172 = vtanh.pop %v168
    %v173 = vtanh.pop %v169
    %v174 = vtanh.pop %v170
    %v175 = vtanh.pop %v171
    %v176 = vld [vmem:[%s1 + $0xa0] sm:$0x3]
    %v177 = vld [vmem:[%s1 + $0xa8] sm:$0x3]
    %vm178 = vcmask 261120
    %v180 = vsel %vm178, %v176, 0
    %182 = vmatprep.subr.mxu0 0.0
    %183 = vmatpush1.msra.mxu0 0.0
    %184 = vmatprep.subr.mxu0 0.0
    %185 = vmatpush1.msra.mxu0 0.0
    %186 = vmatprep.subr.mxu0 0.0
    %187 = vmatpush1.msra.mxu0 0.0
    %188 = vmatprep.subr.mxu0 0.0
    %189 = vmatpush1.msra.mxu0 0.0
    %190 = vmatprep.subr.mxu0 0.0
    %191 = vmatpush1.msra.mxu0 0.0
    %192 = vmatprep.subr.mxu0 0.0
    %193 = vmatpush1.msra.mxu0 0.0
    %194 = vmatprep.subr.mxu0 0.0
    %195 = vmatpush1.msra.mxu0 0.0
    %196 = vmatprep.subr.mxu0 0.0
    %197 = vmatpush1.msra.mxu0 0.0
    %198 = vmatprep.subr.mxu0 0.0
    %199 = vmatpush1.msra.mxu0 0.0
    %200 = vmatprep.subr.mxu0 0.0
    %201 = vmatpush1.msra.mxu0 0.0
    %202 = vmatprep.subr.mxu0 0.0
    %203 = vmatpush1.msra.mxu0 0.0
    %204 = vmatprep.subr.mxu0 0.0
    %205 = vmatpush1.msra.mxu0 0.0
    %206 = vmatprep.subr.mxu0 0.0
    %207 = vmatpush1.msra.mxu0 %v175
    %208 = vmatprep.subr.mxu0 0.0
    %209 = vmatpush1.msra.mxu0 %v174
    %210 = vmatprep.subr.mxu0 0.0
    %211 = vmatpush1.msra.mxu0 %v173
    %212 = vmatprep.subr.mxu0 0.0
    %213 = vmatpush1.msra.mxu0 %v172
    %214 = vmatprep.subr.mxu0 0.0
    %215 = vmatpush2.msra.mxu0 0.0
    %216 = vmatprep.subr.mxu0 0.0
    %217 = vmatpush2.msra.mxu0 0.0
    %218 = vmatprep.subr.mxu0 0.0
    %219 = vmatpush2.msra.mxu0 0.0
    %220 = vmatprep.subr.mxu0 0.0
    %221 = vmatpush2.msra.mxu0 0.0
    %222 = vmatprep.subr.mxu0 0.0
    %223 = vmatpush2.msra.mxu0 0.0
    %224 = vmatprep.subr.mxu0 0.0
    %225 = vmatpush2.msra.mxu0 0.0
    %226 = vmatprep.subr.mxu0 0.0
    %227 = vmatpush2.msra.mxu0 0.0
    %228 = vmatprep.subr.mxu0 0.0
    %229 = vmatpush2.msra.mxu0 0.0
    %230 = vmatprep.subr.mxu0 0.0
    %231 = vmatpush2.msra.mxu0 0.0
    %232 = vmatprep.subr.mxu0 0.0
    %233 = vmatpush2.msra.mxu0 0.0
    %234 = vmatprep.subr.mxu0 0.0
    %235 = vmatpush2.msra.mxu0 0.0
    %236 = vmatprep.subr.mxu0 0.0
    %237 = vmatpush2.msra.mxu0 0.0
    %238 = vmatprep.subr.mxu0 0.0
    %239 = vmatpush2.msra.mxu0 0.0
    %240 = vmatprep.subr.mxu0 0.0
    %241 = vmatpush2.msra.mxu0 0.0
    %242 = vmatprep.subr.mxu0 0.0
    %243 = vmatpush2.msra.mxu0 0.0
    %244 = vmatprep.subr.mxu0 0.0
    %245 = vmatpush2.msra.mxu0 0.0
    %246 = vmatprep.mubr.f32.mxu0 0.0
    %247 = vmatmul.mubr.f32.gmra.mxu0 %v180
    %v248 = vpop.f32.mrf.mxu0
    %v249 = vadd.f32 %v177, %v248
    %v250 = vpop.f32.mrf.mxu0
    %251 = vdwg.mxu0
    %vm252 = vcmask 1041408
    %v253 = vsel %vm252, %v249, -inf
    %254 = vmax.xlane.f32.xlu0 %v253
    %v255 = vpop.xlane.xlu0 %254
    %v256 = vsub.f32 %v249, %v255
    %v257 = vmul.f32 %v256, 1.442695
    %v258 = vpow.pop %v257
    %v259 = vld [vmem:[%s0] sm:$0xff]
    %v260 = vld [vmem:[%s0 + $0x8] sm:$0xff]
    %v261 = vld [vmem:[%s0 + $0x10] sm:$0xff]
    %v262 = vld [vmem:[%s0 + $0x18] sm:$0xff]
    %vm263 = vcmask 517120
    %v264 = vsel %vm263, %v258, 0.0
    %265 = vadd.xlane.f32.xlu0 %v264
    %v266 = vpop.xlane.xlu0 %265
    %vm267 = vcmask 523264
    %v269 = vsel %vm267, %v258, 0
    %v272 = vsel %vm267, %v259, 0
    %v275 = vsel %vm267, %v260, 0
    %v278 = vsel %vm267, %v261, 0
    %v281 = vsel %vm267, %v262, 0
    %283 = vmatprep.subr.mxu0 0.0
    %284 = vmatpush1.xpose.msra.mxu0 0.0
    %285 = vmatprep.subr.mxu0 0.0
    %286 = vmatpush1.xpose.msra.mxu0 0.0
    %287 = vmatprep.subr.mxu0 0.0
    %288 = vmatpush1.xpose.msra.mxu0 0.0
    %289 = vmatprep.subr.mxu0 0.0
    %290 = vmatpush1.xpose.msra.mxu0 0.0
    %291 = vmatprep.subr.mxu0 0.0
    %292 = vmatpush1.xpose.msra.mxu0 0.0
    %293 = vmatprep.subr.mxu0 0.0
    %294 = vmatpush1.xpose.msra.mxu0 0.0
    %295 = vmatprep.subr.mxu0 0.0
    %296 = vmatpush1.xpose.msra.mxu0 0.0
    %297 = vmatprep.subr.mxu0 0.0
    %298 = vmatpush1.xpose.msra.mxu0 0.0
    %299 = vmatprep.subr.mxu0 0.0
    %300 = vmatpush1.xpose.msra.mxu0 0.0
    %301 = vmatprep.subr.mxu0 0.0
    %302 = vmatpush1.xpose.msra.mxu0 0.0
    %303 = vmatprep.subr.mxu0 0.0
    %304 = vmatpush1.xpose.msra.mxu0 0.0
    %305 = vmatprep.subr.mxu0 0.0
    %306 = vmatpush1.xpose.msra.mxu0 0.0
    %307 = vmatprep.subr.mxu0 0.0
    %308 = vmatpush1.xpose.msra.mxu0 %v281
    %309 = vmatprep.subr.mxu0 0.0
    %310 = vmatpush1.xpose.msra.mxu0 %v278
    %311 = vmatprep.subr.mxu0 0.0
    %312 = vmatpush1.xpose.msra.mxu0 %v275
    %313 = vmatprep.subr.mxu0 0.0
    %314 = vmatpush1.xpose.msra.mxu0 %v272
    %315 = vmatprep.subr.mxu0 0.0
    %316 = vmatpush2.xpose.msra.mxu0 0.0
    %317 = vmatprep.subr.mxu0 0.0
    %318 = vmatpush2.xpose.msra.mxu0 0.0
    %319 = vmatprep.subr.mxu0 0.0
    %320 = vmatpush2.xpose.msra.mxu0 0.0
    %321 = vmatprep.subr.mxu0 0.0
    %322 = vmatpush2.xpose.msra.mxu0 0.0
    %323 = vmatprep.subr.mxu0 0.0
    %324 = vmatpush2.xpose.msra.mxu0 0.0
    %325 = vmatprep.subr.mxu0 0.0
    %326 = vmatpush2.xpose.msra.mxu0 0.0
    %327 = vmatprep.subr.mxu0 0.0
    %328 = vmatpush2.xpose.msra.mxu0 0.0
    %329 = vmatprep.subr.mxu0 0.0
    %330 = vmatpush2.xpose.msra.mxu0 0.0
    %331 = vmatprep.subr.mxu0 0.0
    %332 = vmatpush2.xpose.msra.mxu0 0.0
    %333 = vmatprep.subr.mxu0 0.0
    %334 = vmatpush2.xpose.msra.mxu0 0.0
    %335 = vmatprep.subr.mxu0 0.0
    %336 = vmatpush2.xpose.msra.mxu0 0.0
    %337 = vmatprep.subr.mxu0 0.0
    %338 = vmatpush2.xpose.msra.mxu0 0.0
    %339 = vmatprep.subr.mxu0 0.0
    %340 = vmatpush2.xpose.msra.mxu0 0.0
    %341 = vmatprep.subr.mxu0 0.0
    %342 = vmatpush2.xpose.msra.mxu0 0.0
    %343 = vmatprep.subr.mxu0 0.0
    %344 = vmatpush2.xpose.msra.mxu0 0.0
    %345 = vmatprep.subr.mxu0 0.0
    %346 = vmatpush2.xpose.msra.mxu0 0.0
    %347 = vmatprep.mubr.f32.mxu0 0.0
    %348 = vmatmul.mubr.f32.gmra.mxu0 %v269
    %v349 = vpop.f32.mrf.mxu0
    %v350 = vadd.f32 0.0, %v349
    %v351 = vpop.f32.mrf.mxu0
    %352 = vdwg.mxu0
    %v353 = vrcp.pop %v266
    %v354 = vmul.f32 %v350, %v353
    %vm355 = vcmask 253952
    %356 = vst.msk [vmem:[#allocation2] sm:$0x1] %vm355, %v354
    %358 = vrot.lane.b32.xlu0 %v354, 32
    %v359 = vpop.permute.xlu0 %358
    %vm361 = vcmask 517377
    %362 = vst.msk [vmem:[#allocation2 - $0x1] sm:$0x2] %vm361, %v359
    %363 = vrot.lane.b32.xlu0 %v258, 64
    %v364 = vpop.permute.xlu0 %363
    %v366 = vsel %vm263, %v364, 0.0
    %367 = vadd.xlane.f32.xlu0 %v366
    %v368 = vpop.xlane.xlu0 %367
    %369 = vrot.lane.b32.xlu0 %v259, 64
    %v370 = vpop.permute.xlu0 %369
    %371 = vrot.lane.b32.xlu0 %v260, 64
    %v372 = vpop.permute.xlu0 %371
    %373 = vrot.lane.b32.xlu0 %v261, 64
    %v374 = vpop.permute.xlu0 %373
    %375 = vrot.lane.b32.xlu0 %v262, 64
    %v376 = vpop.permute.xlu0 %375
    %v377 = vsel %vm267, %v364, 0
    %v379 = vsel %vm267, %v370, 0
    %v381 = vsel %vm267, %v372, 0
    %v383 = vsel %vm267, %v374, 0
    %v385 = vsel %vm267, %v376, 0
    %387 = vmatprep.subr.mxu0 0.0
    %388 = vmatpush1.xpose.msra.mxu0 0.0
    %389 = vmatprep.subr.mxu0 0.0
    %390 = vmatpush1.xpose.msra.mxu0 0.0
    %391 = vmatprep.subr.mxu0 0.0
    %392 = vmatpush1.xpose.msra.mxu0 0.0
    %393 = vmatprep.subr.mxu0 0.0
    %394 = vmatpush1.xpose.msra.mxu0 0.0
    %395 = vmatprep.subr.mxu0 0.0
    %396 = vmatpush1.xpose.msra.mxu0 0.0
    %397 = vmatprep.subr.mxu0 0.0
    %398 = vmatpush1.xpose.msra.mxu0 0.0
    %399 = vmatprep.subr.mxu0 0.0
    %400 = vmatpush1.xpose.msra.mxu0 0.0
    %401 = vmatprep.subr.mxu0 0.0
    %402 = vmatpush1.xpose.msra.mxu0 0.0
    %403 = vmatprep.subr.mxu0 0.0
    %404 = vmatpush1.xpose.msra.mxu0 0.0
    %405 = vmatprep.subr.mxu0 0.0
    %406 = vmatpush1.xpose.msra.mxu0 0.0
    %407 = vmatprep.subr.mxu0 0.0
    %408 = vmatpush1.xpose.msra.mxu0 0.0
    %409 = vmatprep.subr.mxu0 0.0
    %410 = vmatpush1.xpose.msra.mxu0 0.0
    %411 = vmatprep.subr.mxu0 0.0
    %412 = vmatpush1.xpose.msra.mxu0 %v385
    %413 = vmatprep.subr.mxu0 0.0
    %414 = vmatpush1.xpose.msra.mxu0 %v383
    %415 = vmatprep.subr.mxu0 0.0
    %416 = vmatpush1.xpose.msra.mxu0 %v381
    %417 = vmatprep.subr.mxu0 0.0
    %418 = vmatpush1.xpose.msra.mxu0 %v379
    %419 = vmatprep.subr.mxu0 0.0
    %420 = vmatpush2.xpose.msra.mxu0 0.0
    %421 = vmatprep.subr.mxu0 0.0
    %422 = vmatpush2.xpose.msra.mxu0 0.0
    %423 = vmatprep.subr.mxu0 0.0
    %424 = vmatpush2.xpose.msra.mxu0 0.0
    %425 = vmatprep.subr.mxu0 0.0
    %426 = vmatpush2.xpose.msra.mxu0 0.0
    %427 = vmatprep.subr.mxu0 0.0
    %428 = vmatpush2.xpose.msra.mxu0 0.0
    %429 = vmatprep.subr.mxu0 0.0
    %430 = vmatpush2.xpose.msra.mxu0 0.0
    %431 = vmatprep.subr.mxu0 0.0
    %432 = vmatpush2.xpose.msra.mxu0 0.0
    %433 = vmatprep.subr.mxu0 0.0
    %434 = vmatpush2.xpose.msra.mxu0 0.0
    %435 = vmatprep.subr.mxu0 0.0
    %436 = vmatpush2.xpose.msra.mxu0 0.0
    %437 = vmatprep.subr.mxu0 0.0
    %438 = vmatpush2.xpose.msra.mxu0 0.0
    %439 = vmatprep.subr.mxu0 0.0
    %440 = vmatpush2.xpose.msra.mxu0 0.0
    %441 = vmatprep.subr.mxu0 0.0
    %442 = vmatpush2.xpose.msra.mxu0 0.0
    %443 = vmatprep.subr.mxu0 0.0
    %444 = vmatpush2.xpose.msra.mxu0 0.0
    %445 = vmatprep.subr.mxu0 0.0
    %446 = vmatpush2.xpose.msra.mxu0 0.0
    %447 = vmatprep.subr.mxu0 0.0
    %448 = vmatpush2.xpose.msra.mxu0 0.0
    %449 = vmatprep.subr.mxu0 0.0
    %450 = vmatpush2.xpose.msra.mxu0 0.0
    %451 = vmatprep.mubr.f32.mxu0 0.0
    %452 = vmatmul.mubr.f32.gmra.mxu0 %v377
    %v453 = vpop.f32.mrf.mxu0
    %v454 = vadd.f32 0.0, %v453
    %v455 = vpop.f32.mrf.mxu0
    %456 = vdwg.mxu0
    %v457 = vrcp.pop %v368
    %v458 = vmul.f32 %v454, %v457
    %459 = vst.msk [vmem:[#allocation2 + $0x1] sm:$0x1] %vm355, %v458
    %461 = vrot.lane.b32.xlu0 %v458, 32
    %v462 = vpop.permute.xlu0 %461
    %464 = vst.msk [vmem:[#allocation2] sm:$0x2] %vm361, %v462
    %v465 = vld [vmem:[#allocation2] sm:$0x3]
    %v466 = vld [vmem:[%s1 + $0x40] sm:$0xff]
    %v467 = vld [vmem:[%s1 + $0x48] sm:$0xff]
    %v468 = vld [vmem:[%s1 + $0x50] sm:$0xff]
    %v469 = vld [vmem:[%s1 + $0x58] sm:$0xff]
    %v470 = vld [vmem:[%s1 + $0x60] sm:$0xff]
    %v471 = vld [vmem:[%s1 + $0x68] sm:$0xff]
    %v472 = vld [vmem:[%s1 + $0x70] sm:$0xff]
    %v473 = vld [vmem:[%s1 + $0x78] sm:$0xff]
    %v474 = vld [vmem:[%s1 + $0xb0] sm:$0x3]
    %v476 = vsel %vm267, %v465, 0
    %478 = vmatprep.subr.mxu0 0.0
    %479 = vmatpush1.msra.mxu0 0.0
    %480 = vmatprep.subr.mxu0 0.0
    %481 = vmatpush1.msra.mxu0 0.0
    %482 = vmatprep.subr.mxu0 0.0
    %483 = vmatpush1.msra.mxu0 0.0
    %484 = vmatprep.subr.mxu0 0.0
    %485 = vmatpush1.msra.mxu0 0.0
    %486 = vmatprep.subr.mxu0 0.0
    %487 = vmatpush1.msra.mxu0 0.0
    %488 = vmatprep.subr.mxu0 0.0
    %489 = vmatpush1.msra.mxu0 0.0
    %490 = vmatprep.subr.mxu0 0.0
    %491 = vmatpush1.msra.mxu0 0.0
    %492 = vmatprep.subr.mxu0 0.0
    %493 = vmatpush1.msra.mxu0 0.0
    %494 = vmatprep.subr.mxu0 0.0
    %495 = vmatpush1.msra.mxu0 %v473
    %496 = vmatprep.subr.mxu0 0.0
    %497 = vmatpush1.msra.mxu0 %v472
    %498 = vmatprep.subr.mxu0 0.0
    %499 = vmatpush1.msra.mxu0 %v471
    %500 = vmatprep.subr.mxu0 0.0
    %501 = vmatpush1.msra.mxu0 %v470
    %502 = vmatprep.subr.mxu0 0.0
    %503 = vmatpush1.msra.mxu0 %v469
    %504 = vmatprep.subr.mxu0 0.0
    %505 = vmatpush1.msra.mxu0 %v468
    %506 = vmatprep.subr.mxu0 0.0
    %507 = vmatpush1.msra.mxu0 %v467
    %508 = vmatprep.subr.mxu0 0.0
    %509 = vmatpush1.msra.mxu0 %v466
    %510 = vmatprep.subr.mxu0 0.0
    %511 = vmatpush2.msra.mxu0 0.0
    %512 = vmatprep.subr.mxu0 0.0
    %513 = vmatpush2.msra.mxu0 0.0
    %514 = vmatprep.subr.mxu0 0.0
    %515 = vmatpush2.msra.mxu0 0.0
    %516 = vmatprep.subr.mxu0 0.0
    %517 = vmatpush2.msra.mxu0 0.0
    %518 = vmatprep.subr.mxu0 0.0
    %519 = vmatpush2.msra.mxu0 0.0
    %520 = vmatprep.subr.mxu0 0.0
    %521 = vmatpush2.msra.mxu0 0.0
    %522 = vmatprep.subr.mxu0 0.0
    %523 = vmatpush2.msra.mxu0 0.0
    %524 = vmatprep.subr.mxu0 0.0
    %525 = vmatpush2.msra.mxu0 0.0
    %526 = vmatprep.subr.mxu0 0.0
    %527 = vmatpush2.msra.mxu0 0.0
    %528 = vmatprep.subr.mxu0 0.0
    %529 = vmatpush2.msra.mxu0 0.0
    %530 = vmatprep.subr.mxu0 0.0
    %531 = vmatpush2.msra.mxu0 0.0
    %532 = vmatprep.subr.mxu0 0.0
    %533 = vmatpush2.msra.mxu0 0.0
    %534 = vmatprep.subr.mxu0 0.0
    %535 = vmatpush2.msra.mxu0 0.0
    %536 = vmatprep.subr.mxu0 0.0
    %537 = vmatpush2.msra.mxu0 0.0
    %538 = vmatprep.subr.mxu0 0.0
    %539 = vmatpush2.msra.mxu0 0.0
    %540 = vmatprep.subr.mxu0 0.0
    %541 = vmatpush2.msra.mxu0 0.0
    %542 = vmatprep.mubr.f32.mxu0 0.0
    %543 = vmatmul.mubr.f32.gmra.mxu0 %v476
    %v544 = vpop.f32.mrf.mxu0
    %v545 = vadd.f32 %v474, %v544
    %v546 = vpop.f32.mrf.mxu0
    %547 = vdwg.mxu0
    %v548 = vtanh.pop %v545
    %v549 = vld [vmem:[%s0 + $0x48] sm:$0x3]
    %v550 = vld [vmem:[%s1 + $0x80] sm:$0xff]
    %v551 = vld [vmem:[%s1 + $0x88] sm:$0xff]
    %v552 = vld [vmem:[%s1 + $0x90] sm:$0xff]
    %v553 = vld [vmem:[%s1 + $0x98] sm:$0xff]
    %v554 = vld [vmem:[%s1 + $0xb8] sm:$0x3]
    %v556 = vsel %vm178, %v549, 0
    %558 = vmatprep.subr.mxu0 0.0
    %559 = vmatpush1.msra.mxu0 0.0
    %560 = vmatprep.subr.mxu0 0.0
    %561 = vmatpush1.msra.mxu0 0.0
    %562 = vmatprep.subr.mxu0 0.0
    %563 = vmatpush1.msra.mxu0 0.0
    %564 = vmatprep.subr.mxu0 0.0
    %565 = vmatpush1.msra.mxu0 0.0
    %566 = vmatprep.subr.mxu0 0.0
    %567 = vmatpush1.msra.mxu0 0.0
    %568 = vmatprep.subr.mxu0 0.0
    %569 = vmatpush1.msra.mxu0 0.0
    %570 = vmatprep.subr.mxu0 0.0
    %571 = vmatpush1.msra.mxu0 0.0
    %572 = vmatprep.subr.mxu0 0.0
    %573 = vmatpush1.msra.mxu0 0.0
    %574 = vmatprep.subr.mxu0 0.0
    %575 = vmatpush1.msra.mxu0 0.0
    %576 = vmatprep.subr.mxu0 0.0
    %577 = vmatpush1.msra.mxu0 0.0
    %578 = vmatprep.subr.mxu0 0.0
    %579 = vmatpush1.msra.mxu0 0.0
    %580 = vmatprep.subr.mxu0 0.0
    %581 = vmatpush1.msra.mxu0 0.0
    %582 = vmatprep.subr.mxu0 0.0
    %583 = vmatpush1.msra.mxu0 %v553
    %584 = vmatprep.subr.mxu0 0.0
    %585 = vmatpush1.msra.mxu0 %v552
    %586 = vmatprep.subr.mxu0 0.0
    %587 = vmatpush1.msra.mxu0 %v551
    %588 = vmatprep.subr.mxu0 0.0
    %589 = vmatpush1.msra.mxu0 %v550
    %590 = vmatprep.subr.mxu0 0.0
    %591 = vmatpush2.msra.mxu0 0.0
    %592 = vmatprep.subr.mxu0 0.0
    %593 = vmatpush2.msra.mxu0 0.0
    %594 = vmatprep.subr.mxu0 0.0
    %595 = vmatpush2.msra.mxu0 0.0
    %596 = vmatprep.subr.mxu0 0.0
    %597 = vmatpush2.msra.mxu0 0.0
    %598 = vmatprep.subr.mxu0 0.0
    %599 = vmatpush2.msra.mxu0 0.0
    %600 = vmatprep.subr.mxu0 0.0
    %601 = vmatpush2.msra.mxu0 0.0
    %602 = vmatprep.subr.mxu0 0.0
    %603 = vmatpush2.msra.mxu0 0.0
    %604 = vmatprep.subr.mxu0 0.0
    %605 = vmatpush2.msra.mxu0 0.0
    %606 = vmatprep.subr.mxu0 0.0
    %607 = vmatpush2.msra.mxu0 0.0
    %608 = vmatprep.subr.mxu0 0.0
    %609 = vmatpush2.msra.mxu0 0.0
    %610 = vmatprep.subr.mxu0 0.0
    %611 = vmatpush2.msra.mxu0 0.0
    %612 = vmatprep.subr.mxu0 0.0
    %613 = vmatpush2.msra.mxu0 0.0
    %614 = vmatprep.subr.mxu0 0.0
    %615 = vmatpush2.msra.mxu0 0.0
    %616 = vmatprep.subr.mxu0 0.0
    %617 = vmatpush2.msra.mxu0 0.0
    %618 = vmatprep.subr.mxu0 0.0
    %619 = vmatpush2.msra.mxu0 0.0
    %620 = vmatprep.subr.mxu0 0.0
    %621 = vmatpush2.msra.mxu0 0.0
    %622 = vmatprep.mubr.f32.mxu0 0.0
    %623 = vmatmul.mubr.f32.gmra.mxu0 %v556
    %v624 = vpop.f32.mrf.mxu0
    %v625 = vadd.f32 %v554, %v624
    %v626 = vpop.f32.mrf.mxu0
    %627 = vdwg.mxu0
    %v628 = vtanh.pop %v625
    %v629 = vmul.f32 %v548, %v628
    %630 = vst.msk [vmem:[#allocation3] sm:$0x3] %vm263, %v629
    // Predicated region
    $region10: #{mcb_forward.1} parent=1 // pred_check
      _
    $region11: #{mcb_forward.1} parent=1 // pred_check_branch
      %632 = sbr.rel (0) target = $region13
    $region12: #{mcb_forward.1} parent=1 // pred_region
      %s634 = ssub.s32 32, 32
      %635 = vsyncadd [#allocation4], %s634
      %s637 = sshll.u32 [#allocation3], 4
      %s638 = int_to_ptr.vmem [resolvable:$true] %s637
      %640 = dma.vmem_to_hbm [thread:$0]  %s638, 32, %s2, [#allocation4]
    $region13: #{mcb_forward.1} parent=1 // pred_fallthru
      _
    // Predicated region
    $region14: #{mcb_forward.1} parent=1 // pred_check
      _
    $region15: #{mcb_forward.1} parent=1 // pred_check_branch
      %642 = sbr.rel (0) target = $region17
    $region16: #{mcb_forward.1} parent=1 // pred_region
      %643 = dma.done [#allocation4], 32
    $region17: #{mcb_forward.1} parent=1 // pred_fallthru
      _
    %644 = vsyncpa [#allocation4], 1

</llo_original>
